<compile_context>
chip_gen: v7x
topology: tpu7x:2x2x1
jax: 0.10.0
libtpu: 0.0.40
codegen_flags: <defaults>
</compile_context>

<pallas_src>
import functools

import jax
import jax.numpy as jnp
import numpy as np
from jax.experimental import pallas as pl
from jax.experimental.pallas import tpu as pltpu

LEAKY_SLOPE = 0.2

# (name, kernel_size, gated, n_operands, level)  level: 0=HxW, 1=H/2, 2=H/4.
# Stride-2 convs (enc1_0, enc2_0) are evaluated at their *input* level and the
# output is subsampled afterwards (exactly equivalent for SAME padding).
_ARCH = (
    ("enc0_0", 5, True, 1, 0),
    ("enc0_1", 3, True, 1, 0),
    ("enc1_0", 3, True, 1, 0),
    ("enc1_1", 3, True, 1, 1),
    ("enc2_0", 3, True, 1, 1),
    ("enc2_1", 3, True, 1, 2),
    ("dec2_up", 3, False, 1, 1),
    ("dec2_cv", 3, False, 1, 1),
    ("dec1_up", 3, False, 2, 0),
    ("dec1_cv", 3, False, 1, 0),
    ("dec0_0", 3, False, 2, 0),
    ("dec0_1", 3, False, 1, 0),
)


# --------------------------------------------------------------------------
# Host-side constant builders (numpy, deterministic, cached on shape)
# --------------------------------------------------------------------------
@functools.lru_cache(maxsize=None)
def _tap_mask(h, w, k, p):
    """(h*w, k*k) 0/1 mask: tap (i,j) is in-bounds at flat pixel a*w+b."""
    m = np.zeros((h * w, k * k), np.float32)
    for a in range(h):
        for b in range(w):
            for i in range(k):
                for j in range(k):
                    if 0 <= a + i - p < h and 0 <= b + j - p < w:
                        m[a * w + b, i * k + j] = 1.0
    return m


@functools.lru_cache(maxsize=None)
def _slab_rows(h, w, down):
    """Spatial rows consumed per slab-local resample matmul (static choice).

    Chosen so both the input slab (sr*w rows) and output slab are sublane
    (8-row) aligned and the slab matrix stays small (~O(w^2), never O((hw)^2)
    except for degenerate tiny images where hw itself is small).
    """
    step = 2 if down else 1
    sr = step
    while sr < h:
        out_rows = (sr // 2) * (w // 2) if down else 4 * sr * w
        if (sr * w) % 8 == 0 and out_rows % 8 == 0 and sr * w >= 32:
            break
        sr += step
    if h % sr != 0:
        sr = h          # whole-image fallback (only hit for tiny/odd shapes)
    return sr


@functools.lru_cache(maxsize=None)
def _down_slab_mat(sr, w):
    """(sr/2*w/2, sr*w) 0/1: stride-2 subsample of an sr x w row slab."""
    out = np.zeros((sr // 2 * (w // 2), sr * w), np.float32)
    for a in range(sr // 2):
        for b in range(w // 2):
            out[a * (w // 2) + b, (2 * a) * w + 2 * b] = 1.0
    return out


@functools.lru_cache(maxsize=None)
def _up_slab_mat(sr, w):
    """(4*sr*w, sr*w) 0/1: nearest x2 upsample of an sr x w row slab."""
    out = np.zeros((4 * sr * w, sr * w), np.float32)
    for a in range(2 * sr):
        for b in range(2 * w):
            out[a * (2 * w) + b, (a // 2) * w + b // 2] = 1.0
    return out


# --------------------------------------------------------------------------
# Fused Pallas kernel (one batch element per grid step)
# --------------------------------------------------------------------------
def _leaky(v):
    return jnp.where(v >= 0.0, v, LEAKY_SLOPE * v)


def _unpack_layer_refs(refs):
    """Split the flat const-ref tuple into per-layer (w_sets, b_set)."""
    layers = []
    idx = 0
    for _, _, gated, nops, _ in _ARCH:
        w_sets, b_set = [], []
        for _ in range(2 if gated else 1):          # halves: [feat] or [feat, gate]
            w_sets.append([refs[idx + o] for o in range(nops)])
            idx += nops
            b_set.append(refs[idx])
            idx += 1
        layers.append((w_sets, b_set))
    return layers, idx


def _fused_kernel(roll_sign, H, W, slab_cfg, x_ref, m_ref, *refs):
    o_ref = refs[-1]
    consts = refs[:-1]
    layers, idx = _unpack_layer_refs(consts)
    tap_refs = {                                   # (level, kernel) -> tap-mask ref
        (0, 5): consts[idx + 0],
        (0, 3): consts[idx + 1],
        (1, 3): consts[idx + 2],
        (2, 3): consts[idx + 3],
    }
    d1_ref, d2_ref, uq_ref, uh_ref = consts[idx + 4: idx + 8]

    dims = {0: (H, W), 1: (H // 2, W // 2), 2: (H // 4, W // 4)}

    def conv(xs, layer_idx):
        """SAME conv (+bias, LeakyReLU, optional sigmoid gating) on flat xs.

        Per-tap accumulated MXU matmuls (no im2col buffer); multi-operand
        inputs (K-split skip connections) and split feat/gate weight slabs
        all sum into per-half f32 accumulators.
        """
        _, k, _, _, level = _ARCH[layer_idx]
        h, w = dims[level]
        p = k // 2
        m_rows = h * w
        w_sets, b_set = layers[layer_idx]
        taps = tap_refs[(level, k)][...]                 # (m_rows, k*k) f32 0/1
        n_half = len(w_sets)
        accs = [None] * n_half
        for i in range(k):                                # static unroll
            for j in range(k):
                t = i * k + j
                off = (i - p) * w + (j - p)               # flat source offset
                sh = (roll_sign * off) % m_rows
                mcol = taps[:, t:t + 1]                   # (m_rows, 1) validity
                for op, x in enumerate(xs):
                    shifted = x if sh == 0 else pltpu.roll(x, sh, axis=0)
                    xb = (shifted * mcol).astype(jnp.bfloat16)
                    for hh in range(n_half):              # feat (+ gate) slabs
                        c = jnp.dot(xb, w_sets[hh][op][t],
                                    preferred_element_type=jnp.float32)
                        accs[hh] = c if accs[hh] is None else accs[hh] + c
        outs = [acc + b_ref[...] for acc, b_ref in zip(accs, b_set)]
        if n_half == 2:                                   # gated conv
            return _leaky(outs[0]) * jax.nn.sigmoid(outs[1])
        return _leaky(outs[0])

    def resample(y, mat_ref, key):
        """Exact stride-2 subsample / nearest x2 upsample via slab matmuls."""
        in_rows, n_slabs = slab_cfg[key]
        mat = mat_ref[...]
        if n_slabs == 1:
            return jnp.dot(mat, y, preferred_element_type=jnp.float32)
        pieces = [
            jnp.dot(mat, y[s * in_rows:(s + 1) * in_rows, :],
                    preferred_element_type=jnp.float32)
            for s in range(n_slabs)
        ]
        return jnp.concatenate(pieces, axis=0)

    # masked_imgs = inputs * (1 - masks)
    x0 = x_ref[0] * (1.0 - m_ref[0])                      # (H*W, Cin)

    # ---------------- Encoder ----------------
    c0 = conv([x0], 0)                                    # EncBlock0[0] (k5,p2)
    c0 = conv([c0], 1)                                    # EncBlock0[1]
    t = conv([c0], 2)                                     # EncBlock1[0] stride-2
    c1 = resample(t, d1_ref, "d1")                        # -> H/2 x W/2
    c1 = conv([c1], 3)                                    # EncBlock1[1]
    t = conv([c1], 4)                                     # EncBlock2[0] stride-2
    c2 = resample(t, d2_ref, "d2")                        # -> H/4 x W/4
    c2 = conv([c2], 5)                                    # EncBlock2[1]

    # ---------------- Decoder ----------------
    u = resample(c2, uq_ref, "uq")                        # nearest x2 -> H/2
    u2 = conv([u], 6)                                     # DecBlock2 upconv
    u2 = conv([u2], 7)                                    # DecBlock2 conv
    # skip concat [u2, c1] folded into dec1_up's per-operand weight slabs.
    a = resample(u2, uh_ref, "uh")                        # nearest x2 -> H
    b = resample(c1, uh_ref, "uh")
    u1 = conv([a, b], 8)                                  # DecBlock1 upconv
    u1 = conv([u1], 9)                                    # DecBlock1 conv
    # skip concat [u1, c0] folded into dec0_0's per-operand weight slabs.
    f = conv([u1, c0], 10)                                # DecBlock0[0]
    f = conv([f], 11)                                     # DecBlock0[1]

    o_ref[0] = f                                          # (H*W, latent) f32


# --------------------------------------------------------------------------
# Roll-convention probe (tiny one-off kernel; cached)
# --------------------------------------------------------------------------
_ROLL_SIGN_CACHE = []


def _roll_sign():
    """Determine pltpu.roll's shift convention on the actual backend once."""
    if not _ROLL_SIGN_CACHE:
        def k_(x_ref, o_ref):
            o_ref[...] = pltpu.roll(x_ref[...], 1, axis=0)

        x = jnp.broadcast_to(jnp.arange(8, dtype=jnp.float32)[:, None],
                             (8, 128))
        y = pl.pallas_call(
            k_, out_shape=jax.ShapeDtypeStruct((8, 128), jnp.float32))(x)
        # jnp.roll convention: result[0] == x[-1] == 7  ->  shift = -offset.
        _ROLL_SIGN_CACHE.append(-1 if float(y[0, 0]) == 7.0 else 1)
    return _ROLL_SIGN_CACHE[0]


# --------------------------------------------------------------------------
# Public forward wrapper
# --------------------------------------------------------------------------
def _build_consts(params, H, W):
    """Flat list of kernel constants + static slab config, in kernel order."""
    consts = []
    for name, k, gated, nops, _ in _ARCH:
        wq = jnp.asarray(params[name]["w"], jnp.float32)   # (k, k, cin, ctot)
        bq = jnp.asarray(params[name]["b"], jnp.float32)
        cin, ctot = wq.shape[2], wq.shape[3]
        wf = wq.reshape(k * k, cin, ctot)
        bf = bq.reshape(1, ctot)
        if gated:                                          # split feat / gate
            co = ctot // 2
            halves = [(wf[..., :co], bf[:, :co]), (wf[..., co:], bf[:, co:])]
        else:
            halves = [(wf, bf)]
        for wh, bh in halves:
            if nops == 2:                                  # split skip-concat K
                ca = cin // 2
                consts.append(wh[:, :ca, :].astype(jnp.bfloat16))
                consts.append(wh[:, ca:, :].astype(jnp.bfloat16))
            else:
                consts.append(wh.astype(jnp.bfloat16))
            consts.append(bh)

    # Tap-validity masks (exact 0/1), one per (resolution, kernel) pair used.
    consts.append(jnp.asarray(_tap_mask(H, W, 5, 2)))
    consts.append(jnp.asarray(_tap_mask(H, W, 3, 1)))
    consts.append(jnp.asarray(_tap_mask(H // 2, W // 2, 3, 1)))
    consts.append(jnp.asarray(_tap_mask(H // 4, W // 4, 3, 1)))

    # Slab-local down/up-sample selection matrices (small, not O((HW)^2)).
    slab_cfg = {}
    sr = _slab_rows(H, W, True)
    slab_cfg["d1"] = (sr * W, H // sr)
    consts.append(jnp.asarray(_down_slab_mat(sr, W)))
    sr = _slab_rows(H // 2, W // 2, True)
    slab_cfg["d2"] = (sr * (W // 2), (H // 2) // sr)
    consts.append(jnp.asarray(_down_slab_mat(sr, W // 2)))
    sr = _slab_rows(H // 4, W // 4, False)
    slab_cfg["uq"] = (sr * (W // 4), (H // 4) // sr)
    consts.append(jnp.asarray(_up_slab_mat(sr, W // 4)))
    sr = _slab_rows(H // 2, W // 2, False)
    slab_cfg["uh"] = (sr * (W // 2), (H // 2) // sr)
    consts.append(jnp.asarray(_up_slab_mat(sr, W // 2)))
    return consts, slab_cfg


def gated_deform_enc_dec_forward(params, inputs_nchw, masks_nchw):
    N, Cin, H, W = inputs_nchw.shape
    assert H % 4 == 0 and W % 4 == 0
    L = params["dec0_1"]["w"].shape[-1]
    HW = H * W

    # NCHW -> flat NHWC (N, H*W, C): pure layout glue at the boundary.
    x = jnp.transpose(inputs_nchw, (0, 2, 3, 1)).reshape(N, HW, Cin)
    x = x.astype(jnp.float32)
    m = jnp.transpose(masks_nchw, (0, 2, 3, 1)).reshape(N, HW, 1)
    m = m.astype(jnp.float32)

    consts, slab_cfg = _build_consts(params, H, W)

    def _const_spec(a):
        nd = a.ndim
        return pl.BlockSpec(a.shape, lambda n, _nd=nd: (0,) * _nd)

    kern = functools.partial(_fused_kernel, _roll_sign(), H, W, slab_cfg)
    out_flat = pl.pallas_call(
        kern,
        out_shape=jax.ShapeDtypeStruct((N, HW, L), jnp.float32),
        grid=(N,),
        in_specs=[
            pl.BlockSpec((1, HW, Cin), lambda n: (n, 0, 0)),
            pl.BlockSpec((1, HW, 1), lambda n: (n, 0, 0)),
        ] + [_const_spec(a) for a in consts],
        out_specs=pl.BlockSpec((1, HW, L), lambda n: (n, 0, 0)),
        compiler_params=pltpu.CompilerParams(
            dimension_semantics=("parallel",),       # v7x: 2 TCs, 1 batch each
            vmem_limit_bytes=32 * 1024 * 1024),
    )(x, m, *consts)

    # flat NHWC -> NCHW
    return jnp.transpose(out_flat.reshape(N, H, W, L), (0, 3, 1, 2))


# --------------------------------------------------------------------------
# Parameters
# --------------------------------------------------------------------------
def _init_conv(key, k, cin, cout, gated=False):
    ctot = 2 * cout if gated else cout
    wk, bk = jax.random.split(key)
    scale = 1.0 / float(np.sqrt(k * k * cin))
    w = jax.random.uniform(wk, (k, k, cin, ctot), jnp.float32, -scale, scale)
    b = jax.random.uniform(bk, (ctot,), jnp.float32, -scale, scale)
    return {"w": w, "b": b}


def init_params(key, in_channels, latent):
    L = latent
    cfgs = [
        ("enc0_0", (5, in_channels, L, True)),
        ("enc0_1", (3, L, L, True)),
        ("enc1_0", (3, L, 2 * L, True)),
        ("enc1_1", (3, 2 * L, 2 * L, True)),
        ("enc2_0", (3, 2 * L, 4 * L, True)),
        ("enc2_1", (3, 4 * L, 4 * L, True)),
        ("dec2_up", (3, 4 * L, 2 * L, False)),
        ("dec2_cv", (3, 2 * L, 2 * L, False)),
        ("dec1_up", (3, 4 * L, L, False)),
        ("dec1_cv", (3, L, L, False)),
        ("dec0_0", (3, 2 * L, L, False)),
        ("dec0_1", (3, L, L, False)),
    ]
    keys = jax.random.split(key, len(cfgs))
    return {name: _init_conv(kk, ks, cin, cout, gated)
            for kk, (name, (ks, cin, cout, gated)) in zip(keys, cfgs)}


# --------------------------------------------------------------------------
# Pure-JAX/XLA reference (same bf16-operand / f32-accumulate precision)
# --------------------------------------------------------------------------
def _ref_forward(params, inputs_nchw, masks_nchw):
    x = jnp.transpose(inputs_nchw, (0, 2, 3, 1))
    m = jnp.transpose(masks_nchw, (0, 2, 3, 1))
    x = x * (1.0 - m)

    def conv(h, name, stride, pad, gated):
        pr = params[name]
        y = jax.lax.conv_general_dilated(
            h.astype(jnp.bfloat16), pr["w"].astype(jnp.bfloat16),
            (stride, stride), [(pad, pad), (pad, pad)],
            dimension_numbers=("NHWC", "HWIO", "NHWC"),
            preferred_element_type=jnp.float32)
        y = y + pr["b"][None, None, None, :]
        if gated:
            c = pr["w"].shape[-1] // 2
            feat, gate = y[..., :c], y[..., c:]
            return (jnp.where(feat >= 0, feat, LEAKY_SLOPE * feat)
                    * jax.nn.sigmoid(gate))
        return jnp.where(y >= 0, y, LEAKY_SLOPE * y)

    def up2(h):
        return jnp.repeat(jnp.repeat(h, 2, axis=1), 2, axis=2)

    c0 = conv(x, "enc0_0", 1, 2, True)
    c0 = conv(c0, "enc0_1", 1, 1, True)
    c1 = conv(c0, "enc1_0", 2, 1, True)
    c1 = conv(c1, "enc1_1", 1, 1, True)
    c2 = conv(c1, "enc2_0", 2, 1, True)
    c2 = conv(c2, "enc2_1", 1, 1, True)
    u2 = conv(up2(c2), "dec2_up", 1, 1, False)
    u2 = conv(u2, "dec2_cv", 1, 1, False)
    s2 = jnp.concatenate([u2, c1], axis=-1)
    u1 = conv(up2(s2), "dec1_up", 1, 1, False)
    u1 = conv(u1, "dec1_cv", 1, 1, False)
    s1 = jnp.concatenate([u1, c0], axis=-1)
    f = conv(s1, "dec0_0", 1, 1, False)
    f = conv(f, "dec0_1", 1, 1, False)
    return jnp.transpose(f, (0, 3, 1, 2))


# --------------------------------------------------------------------------
if __name__ == "__main__":
    key = jax.random.PRNGKey(0)
    k_in, k_mask, k_param = jax.random.split(key, 3)

    N, C_in, H, W = 2, 4, 16, 16
    latent = 8
    upsample_mode = "nearest"  # noqa: F841  (documented choice of mode)

    inputs = jax.random.normal(k_in, (N, C_in, H, W), jnp.float32)
    masks = (jax.random.uniform(k_mask, (N, 1, H, W)) > 0.5).astype(jnp.float32)
    params = init_params(k_param, C_in, latent)

    out = gated_deform_enc_dec_forward(params, inputs, masks)
    out = jax.block_until_ready(out)

    assert out.shape == (N, latent, H, W), out.shape
    assert bool(jnp.all(jnp.isfinite(out)))

    # Structural correctness check against an XLA reference using the same
    # bf16-operand / f32-accumulate precision as the kernel's MXU path.
    ref = _ref_forward(params, inputs, masks)
    assert bool(jnp.allclose(out, ref, atol=2e-3, rtol=2e-2)), (
        float(jnp.max(jnp.abs(out - ref))))

    print("KERNEL_OK")
</pallas_src>

<mosaic_0001>
module attributes {stable_mosaic.version = 11 : i64} {
  func.func @k_(%arg0: memref<8x128xf32, #tpu.memory_space<vmem>>, %arg1: memref<8x128xf32, #tpu.memory_space<vmem>>) attributes {dimension_semantics = [], scalar_prefetch = 0 : i64, scratch_operands = 0 : i64, tpu.core_type = #tpu.core_type<tc>} {
    %c0 = arith.constant 0 : index
    %c0_0 = arith.constant 0 : index
    %0 = vector.load %arg0[%c0, %c0_0] : memref<8x128xf32, #tpu.memory_space<vmem>>, vector<8x128xf32>
    %c1_i32 = arith.constant 1 : i32
    %1 = tpu.dynamic_rotate %0 by %c1_i32 dim 0 : vector<8x128xf32>, i32 -> vector<8x128xf32>
    %c0_1 = arith.constant 0 : index
    %c0_2 = arith.constant 0 : index
    %2 = vector.load %arg1[%c0_1, %c0_2] : memref<8x128xf32, #tpu.memory_space<vmem>>, vector<8x128xf32>
    tpu.vector_store %arg1[%c0_1, %c0_2], %1 {strides = array<i32>} : memref<8x128xf32, #tpu.memory_space<vmem>>, vector<8x128xf32>,
    return
  }
}

</mosaic_0001>

<llo_original>
// kernel: tpu_custom_call.1
$region0: #{tpu_custom_call.1}
  #allocation0 [shape = 'u32[]', space=smem, size = 0x4, offset = 0x4, fixed_abs, tag = 'smem constant byte address 0x4 - core index']
  #allocation1 [shape = 'u32[144,128]{1,0:T(1,128)}', space=vmem, size = 0x12000, scoped, tag = 'internal scratch']
  %s0 = inlined_call_operand.hbm [shape: f32[8,128], index: 0, kind: input, shape index: {}]
  %s1 = inlined_call_operand.hbm [shape: f32[8,128], index: 1, kind: output, shape index: {}]
  %s2 = sld [smem:[#allocation0]]
  $region18: #{tpu_custom_call.1} parent=0
    _
  %s4 = ssub.s32 1, %s2
  %s5 = scalar_select 0, %s4, %s2
  $region1: #{tpu_custom_call.1} parent=0
    #allocation2 [shape = 'u8[4096]{0}', space=vmem, size = 0x1000, scoped, tag = 'input window, operand 0, single buffered']
    #allocation3 [shape = 's32[1]{0}', space=sflag, size = 0x4, scoped, tag = 'scoped memory for tpu_custom_call.1']
    #allocation4 [shape = 's32[1]{0}', space=sflag, size = 0x4, scoped, tag = 'scoped memory for tpu_custom_call.1']
    #allocation5 [shape = 'u8[4096]{0}', space=vmem, size = 0x1000, scoped, tag = 'output window, operand 0, single buffered']
    %6 = vsyncpa [#allocation3], 0
    %7 = vsyncpa [#allocation4], 0
    // Predicated region
    $region2: #{tpu_custom_call.1} parent=1 // pred_check
      _
    $region3: #{tpu_custom_call.1} parent=1 // pred_check_branch
      %9 = sbr.rel (0) target = $region5
    $region4: #{tpu_custom_call.1} parent=1 // pred_region
      %s11 = ssub.s32 128, 128
      %12 = vsyncadd [#allocation3], %s11
      %s14 = sshll.u32 [#allocation2], 4
      %s15 = int_to_ptr.vmem [resolvable:$true] %s14
      %17 = dma.hbm_to_vmem [thread:$0]  %s0, 128, %s15, [#allocation3]
    $region5: #{tpu_custom_call.1} parent=1 // pred_fallthru
      _
    // Predicated region
    $region6: #{tpu_custom_call.1} parent=1 // pred_check
      _
    $region7: #{tpu_custom_call.1} parent=1 // pred_check_branch
      %19 = sbr.rel (0) target = $region9
    $region8: #{tpu_custom_call.1} parent=1 // pred_region
      %20 = dma.done [#allocation3], 128
    $region9: #{tpu_custom_call.1} parent=1 // pred_fallthru
      _
    %v21 = vld [vmem:[#allocation2] sm:$0xff]
    %v22 = vrot.slane %v21, 7
    %23 = vst [vmem:[#allocation5] sm:$0xff] %v22
    // Predicated region
    $region10: #{tpu_custom_call.1} parent=1 // pred_check
      _
    $region11: #{tpu_custom_call.1} parent=1 // pred_check_branch
      %25 = sbr.rel (0) target = $region13
    $region12: #{tpu_custom_call.1} parent=1 // pred_region
      %s27 = ssub.s32 128, 128
      %28 = vsyncadd [#allocation4], %s27
      %s30 = sshll.u32 [#allocation5], 4
      %s31 = int_to_ptr.vmem [resolvable:$true] %s30
      %33 = dma.vmem_to_hbm [thread:$0]  %s31, 128, %s1, [#allocation4]
    $region13: #{tpu_custom_call.1} parent=1 // pred_fallthru
      _
    // Predicated region
    $region14: #{tpu_custom_call.1} parent=1 // pred_check
      _
    $region15: #{tpu_custom_call.1} parent=1 // pred_check_branch
      %35 = sbr.rel (0) target = $region17
    $region16: #{tpu_custom_call.1} parent=1 // pred_region
      %36 = dma.done [#allocation4], 128
    $region17: #{tpu_custom_call.1} parent=1 // pred_fallthru
      _
    %37 = vsyncpa [#allocation3], 1
    %38 = vsyncpa [#allocation4], 1

</llo_original>
